<compile_context>
chip_gen: v6e
topology: v6e:2x2x1
jax: 0.10.0
libtpu: 0.0.40
codegen_flags: <defaults>
</compile_context>

<pallas_src>
import functools

import jax
import jax.numpy as jnp
from jax.experimental import pallas as pl
from jax.experimental.pallas import tpu as pltpu


def _round_up(x, m):
    return ((x + m - 1) // m) * m


def _ffn_kernel(x_ref, w1t_ref, w2t_ref, gamma_ref, beta_ref,
                out_ref, acc_ref, *, eps):
    # grid = (row_tiles, dff_tiles); dff is the reduction axis (last).
    f = pl.program_id(1)

    @pl.when(f == 0)
    def _():
        acc_ref[...] = jnp.zeros_like(acc_ref)

    x = x_ref[...]                                                # [bm, d_model]
    # First linear (pre-transposed weight: x @ W1^T tile) + ReLU.
    h = jnp.dot(x, w1t_ref[...], preferred_element_type=jnp.float32)   # [bm, bf]
    h = jnp.maximum(h, 0.0)
    # Second linear, accumulated over d_ff tiles.
    acc_ref[...] += jnp.dot(h, w2t_ref[...],
                            preferred_element_type=jnp.float32)        # [bm, d_model]

    @pl.when(f == pl.num_programs(1) - 1)
    def _():
        # Residual add + LayerNorm (f32 statistics), single lane-dense store.
        y = acc_ref[...] + x.astype(jnp.float32)
        mean = jnp.mean(y, axis=-1, keepdims=True)
        var = jnp.mean((y - mean) ** 2, axis=-1, keepdims=True)
        y_norm = (y - mean) * jax.lax.rsqrt(var + eps)
        out_ref[...] = (y_norm * gamma_ref[...] + beta_ref[...]).astype(out_ref.dtype)


def feed_forward_net(inputs, W1, W2, gamma, beta, *, eps=1e-5,
                     block_m=256, block_f=512):
    """inputs: [B, L, d_model]; W1: (d_ff, d_model); W2: (d_model, d_ff)."""
    B, L, d_model = inputs.shape
    d_ff = W1.shape[0]
    M = B * L

    # Flatten batch*seq into one row axis; pre-transpose weights (no in-kernel .T).
    x2 = inputs.reshape(M, d_model)
    w1t = W1.T                       # (d_model, d_ff)
    w2t = W2.T                       # (d_ff, d_model)
    gamma2 = gamma.reshape(1, d_model)
    beta2 = beta.reshape(1, d_model)

    # Row tiling (sublane-aligned); pad rows so the grid divides evenly.
    bm = min(block_m, _round_up(M, 8))
    M_pad = _round_up(M, bm)
    if M_pad != M:
        x2 = jnp.pad(x2, ((0, M_pad - M), (0, 0)))

    # d_ff tiling for the reduction axis; pad with zeros (ReLU(0)=0 -> no effect).
    if d_ff <= block_f:
        bf = d_ff
        F_pad = d_ff
    else:
        bf = block_f
        F_pad = _round_up(d_ff, bf)
        if F_pad != d_ff:
            w1t = jnp.pad(w1t, ((0, 0), (0, F_pad - d_ff)))
            w2t = jnp.pad(w2t, ((0, F_pad - d_ff), (0, 0)))

    grid = (M_pad // bm, F_pad // bf)

    kernel = functools.partial(_ffn_kernel, eps=eps)

    out = pl.pallas_call(
        kernel,
        out_shape=jax.ShapeDtypeStruct((M_pad, d_model), inputs.dtype),
        grid=grid,
        in_specs=[
            pl.BlockSpec((bm, d_model), lambda i, f: (i, 0)),   # x rows (reused across f)
            pl.BlockSpec((d_model, bf), lambda i, f: (0, f)),   # W1^T tile
            pl.BlockSpec((bf, d_model), lambda i, f: (f, 0)),   # W2^T tile
            pl.BlockSpec((1, d_model), lambda i, f: (0, 0)),    # gamma (loaded once)
            pl.BlockSpec((1, d_model), lambda i, f: (0, 0)),    # beta  (loaded once)
        ],
        out_specs=pl.BlockSpec((bm, d_model), lambda i, f: (i, 0)),
        scratch_shapes=[pltpu.VMEM((bm, d_model), jnp.float32)],
        compiler_params=pltpu.CompilerParams(
            dimension_semantics=("parallel", "arbitrary")),
    )(x2, w1t, w2t, gamma2, beta2)

    return out[:M].reshape(B, L, d_model)


def _reference(inputs, W1, W2, gamma, beta, eps=1e-5):
    """Pure-JAX reference mirroring the PyTorch forward."""
    h = jnp.maximum(inputs @ W1.T, 0.0)
    output = h @ W2.T + inputs
    mean = jnp.mean(output, axis=-1, keepdims=True)
    var = jnp.mean((output - mean) ** 2, axis=-1, keepdims=True)
    return (output - mean) / jnp.sqrt(var + eps) * gamma + beta


if __name__ == "__main__":
    B, L = 2, 8
    d_model, d_ff = 32, 128

    key = jax.random.PRNGKey(0)
    k1, k2, k3 = jax.random.split(key, 3)

    inputs = jax.random.normal(k1, (B, L, d_model), jnp.float32)

    # nn.Linear(bias=False) weights, shape (out_features, in_features).
    s1 = 1.0 / jnp.sqrt(jnp.float32(d_model))
    s2 = 1.0 / jnp.sqrt(jnp.float32(d_ff))
    W1 = jax.random.uniform(k2, (d_ff, d_model), jnp.float32, -s1, s1)
    W2 = jax.random.uniform(k3, (d_model, d_ff), jnp.float32, -s2, s2)
    gamma = jnp.ones((d_model,), jnp.float32)    # nn.LayerNorm default affine init
    beta = jnp.zeros((d_model,), jnp.float32)

    out = feed_forward_net(inputs, W1, W2, gamma, beta)
    out = jax.block_until_ready(out)

    ref = _reference(inputs, W1, W2, gamma, beta)

    assert out.shape == (B, L, d_model)
    assert jnp.allclose(out, ref, atol=1e-4, rtol=1e-4)

    print("KERNEL_OK")
</pallas_src>

<mosaic_0001>
module attributes {stable_mosaic.version = 11 : i64} {
  func.func @_ffn_kernel(%arg0: i32, %arg1: i32, %arg2: memref<16x32xf32, #tpu.memory_space<vmem>>, %arg3: memref<32x128xf32, #tpu.memory_space<vmem>>, %arg4: memref<128x32xf32, #tpu.memory_space<vmem>>, %arg5: memref<1x32xf32, #tpu.memory_space<vmem>>, %arg6: memref<1x32xf32, #tpu.memory_space<vmem>>, %arg7: memref<16x32xf32, #tpu.memory_space<vmem>>, %arg8: memref<16x32xf32, #tpu.memory_space<vmem>>) attributes {dimension_semantics = [#tpu.dimension_semantics<parallel>, #tpu.dimension_semantics<arbitrary>], iteration_bounds = array<i64: 1, 1>, scalar_prefetch = 0 : i64, scratch_operands = 1 : i64, tpu.core_type = #tpu.core_type<tc>, window_params = [{transform_indices = @transform_0, window_bounds = array<i64: 16, 32>}, {transform_indices = @transform_1, window_bounds = array<i64: 32, 128>}, {transform_indices = @transform_2, window_bounds = array<i64: 128, 32>}, {pipeline_mode = #tpu.pipeline_mode<synchronous>, transform_indices = @transform_3, window_bounds = array<i64: 1, 32>}, {pipeline_mode = #tpu.pipeline_mode<synchronous>, transform_indices = @transform_4, window_bounds = array<i64: 1, 32>}, {transform_indices = @transform_5, window_bounds = array<i64: 16, 32>}]} {
    %c0_i32 = arith.constant 0 : i32
    %0 = arith.cmpi eq, %arg1, %c0_i32 : i32
    %1 = arith.extui %0 : i1 to i32
    %c0_i32_0 = arith.constant 0 : i32
    %2 = arith.cmpi ne, %1, %c0_i32_0 : i32
    scf.if %2 {
      %cst_14 = arith.constant 0.000000e+00 : f32
      %16 = vector.broadcast %cst_14 : f32 to vector<16x32xf32>
      %c0_15 = arith.constant 0 : index
      %c0_16 = arith.constant 0 : index
      %17 = vector.load %arg8[%c0_15, %c0_16] : memref<16x32xf32, #tpu.memory_space<vmem>>, vector<16x32xf32>
      tpu.vector_store %arg8[%c0_15, %c0_16], %16 {strides = array<i32>} : memref<16x32xf32, #tpu.memory_space<vmem>>, vector<16x32xf32>,
    } else {
    }
    %c0 = arith.constant 0 : index
    %c0_1 = arith.constant 0 : index
    %3 = vector.load %arg2[%c0, %c0_1] : memref<16x32xf32, #tpu.memory_space<vmem>>, vector<16x32xf32>
    %c0_2 = arith.constant 0 : index
    %c0_3 = arith.constant 0 : index
    %4 = vector.load %arg3[%c0_2, %c0_3] : memref<32x128xf32, #tpu.memory_space<vmem>>, vector<32x128xf32>
    %cst = arith.constant dense<0.000000e+00> : vector<16x128xf32>
    %5 = tpu.matmul %3, %4, %cst {dimension_numbers = #tpu.dot_dimension_numbers<[1], [0], [0], [1], [0, 0, 1, 1], [], []>} : vector<16x32xf32>, vector<32x128xf32>, vector<16x128xf32> -> vector<16x128xf32>
    %cst_4 = arith.constant 0.000000e+00 : f32
    %6 = vector.broadcast %cst_4 : f32 to vector<16x128xf32>
    %7 = arith.maximumf %5, %6 : vector<16x128xf32>
    %c0_5 = arith.constant 0 : index
    %c0_6 = arith.constant 0 : index
    %8 = vector.load %arg8[%c0_5, %c0_6] : memref<16x32xf32, #tpu.memory_space<vmem>>, vector<16x32xf32>
    %c0_7 = arith.constant 0 : index
    %c0_8 = arith.constant 0 : index
    %9 = vector.load %arg4[%c0_7, %c0_8] : memref<128x32xf32, #tpu.memory_space<vmem>>, vector<128x32xf32>
    %cst_9 = arith.constant dense<0.000000e+00> : vector<16x32xf32>
    %10 = tpu.matmul %7, %9, %cst_9 {dimension_numbers = #tpu.dot_dimension_numbers<[1], [0], [0], [1], [0, 0, 1, 1], [], []>} : vector<16x128xf32>, vector<128x32xf32>, vector<16x32xf32> -> vector<16x32xf32>
    %11 = arith.addf %8, %10 : vector<16x32xf32>
    %c0_10 = arith.constant 0 : index
    %c0_11 = arith.constant 0 : index
    %12 = vector.load %arg8[%c0_10, %c0_11] : memref<16x32xf32, #tpu.memory_space<vmem>>, vector<16x32xf32>
    tpu.vector_store %arg8[%c0_10, %c0_11], %11 {strides = array<i32>} : memref<16x32xf32, #tpu.memory_space<vmem>>, vector<16x32xf32>,
    %c0_i32_12 = arith.constant 0 : i32
    %13 = arith.cmpi eq, %arg1, %c0_i32_12 : i32
    %14 = arith.extui %13 : i1 to i32
    %c0_i32_13 = arith.constant 0 : i32
    %15 = arith.cmpi ne, %14, %c0_i32_13 : i32
    scf.if %15 {
      %c0_14 = arith.constant 0 : index
      %c0_15 = arith.constant 0 : index
      %16 = vector.load %arg8[%c0_14, %c0_15] : memref<16x32xf32, #tpu.memory_space<vmem>>, vector<16x32xf32>
      %17 = arith.addf %16, %3 : vector<16x32xf32>
      %cst_16 = arith.constant dense<0.000000e+00> : vector<16xf32>
      %18 = vector.multi_reduction <add>, %17, %cst_16 [1] : vector<16x32xf32> to vector<16xf32>
      %19 = vector.shape_cast %18 : vector<16xf32> to vector<16x1xf32>
      %cst_17 = arith.constant 3.200000e+01 : f32
      %20 = vector.broadcast %cst_17 : f32 to vector<16x1xf32>
      %21 = arith.divf %19, %20 : vector<16x1xf32>
      %22 = vector.broadcast %21 : vector<16x1xf32> to vector<16x32xf32>
      %23 = arith.subf %17, %22 : vector<16x32xf32>
      %24 = arith.mulf %23, %23 : vector<16x32xf32>
      %cst_18 = arith.constant dense<0.000000e+00> : vector<16xf32>
      %25 = vector.multi_reduction <add>, %24, %cst_18 [1] : vector<16x32xf32> to vector<16xf32>
      %26 = vector.shape_cast %25 : vector<16xf32> to vector<16x1xf32>
      %cst_19 = arith.constant 3.200000e+01 : f32
      %27 = vector.broadcast %cst_19 : f32 to vector<16x1xf32>
      %28 = arith.divf %26, %27 : vector<16x1xf32>
      %29 = vector.broadcast %21 : vector<16x1xf32> to vector<16x32xf32>
      %30 = arith.subf %17, %29 : vector<16x32xf32>
      %cst_20 = arith.constant 9.99999974E-6 : f32
      %31 = vector.broadcast %cst_20 : f32 to vector<16x1xf32>
      %32 = arith.addf %28, %31 : vector<16x1xf32>
      %33 = math.rsqrt %32 : vector<16x1xf32>
      %34 = vector.broadcast %33 : vector<16x1xf32> to vector<16x32xf32>
      %35 = arith.mulf %30, %34 : vector<16x32xf32>
      %c0_21 = arith.constant 0 : index
      %c0_22 = arith.constant 0 : index
      %36 = vector.load %arg5[%c0_21, %c0_22] : memref<1x32xf32, #tpu.memory_space<vmem>>, vector<1x32xf32>
      %37 = vector.broadcast %36 : vector<1x32xf32> to vector<16x32xf32>
      %38 = arith.mulf %35, %37 : vector<16x32xf32>
      %c0_23 = arith.constant 0 : index
      %c0_24 = arith.constant 0 : index
      %39 = vector.load %arg6[%c0_23, %c0_24] : memref<1x32xf32, #tpu.memory_space<vmem>>, vector<1x32xf32>
      %40 = vector.broadcast %39 : vector<1x32xf32> to vector<16x32xf32>
      %41 = arith.addf %38, %40 : vector<16x32xf32>
      %c0_25 = arith.constant 0 : index
      %c0_26 = arith.constant 0 : index
      %42 = vector.load %arg7[%c0_25, %c0_26] : memref<16x32xf32, #tpu.memory_space<vmem>>, vector<16x32xf32>
      tpu.vector_store %arg7[%c0_25, %c0_26], %41 {strides = array<i32>} : memref<16x32xf32, #tpu.memory_space<vmem>>, vector<16x32xf32>,
    } else {
    }
    return
  }
  func.func @transform_0(%arg0: i32, %arg1: i32) -> (i32, i32) {
    %c0_i32 = arith.constant 0 : i32
    %c0_i32_0 = arith.constant 0 : i32
    return %arg0, %c0_i32 : i32, i32
  }
  func.func @transform_1(%arg0: i32, %arg1: i32) -> (i32, i32) {
    %c0_i32 = arith.constant 0 : i32
    %c0_i32_0 = arith.constant 0 : i32
    return %c0_i32, %arg1 : i32, i32
  }
  func.func @transform_2(%arg0: i32, %arg1: i32) -> (i32, i32) {
    %c0_i32 = arith.constant 0 : i32
    %c0_i32_0 = arith.constant 0 : i32
    return %arg1, %c0_i32 : i32, i32
  }
  func.func @transform_3(%arg0: i32, %arg1: i32) -> (i32, i32) {
    %c0_i32 = arith.constant 0 : i32
    %c0_i32_0 = arith.constant 0 : i32
    %c0_i32_1 = arith.constant 0 : i32
    return %c0_i32, %c0_i32_0 : i32, i32
  }
  func.func @transform_4(%arg0: i32, %arg1: i32) -> (i32, i32) {
    %c0_i32 = arith.constant 0 : i32
    %c0_i32_0 = arith.constant 0 : i32
    %c0_i32_1 = arith.constant 0 : i32
    return %c0_i32, %c0_i32_0 : i32, i32
  }
  func.func @transform_5(%arg0: i32, %arg1: i32) -> (i32, i32) {
    %c0_i32 = arith.constant 0 : i32
    %c0_i32_0 = arith.constant 0 : i32
    return %arg0, %c0_i32 : i32, i32
  }
}

</mosaic_0001>

<llo_original>
// kernel: tpu_custom_call.1
$region0: #{tpu_custom_call.1}
  #allocation0 [shape = 'u32[]', space=smem, size = 0x4, offset = 0x4, fixed_abs, tag = 'smem constant byte address 0x4 - core index']
  #allocation1 [shape = 'u32[144,128]{1,0:T(1,128)}', space=vmem, size = 0x12000, scoped, tag = 'internal scratch']
  #allocation2 [shape = 'f32[16,32]{1,0:T(8,128)}', space=vmem, size = 0x2000, scoped, tag = 'scratch operand']
  %s0 = inlined_call_operand.vmem [shape: f32[16,32], index: 0, kind: input, shape index: {}]
  %s1 = inlined_call_operand.vmem [shape: f32[32,128], index: 1, kind: input, shape index: {}]
  %s2 = inlined_call_operand.vmem [shape: f32[128,32], index: 2, kind: input, shape index: {}]
  %s3 = inlined_call_operand.vmem [shape: f32[1,32], index: 3, kind: input, shape index: {}]
  %s4 = inlined_call_operand.vmem [shape: f32[1,32], index: 4, kind: input, shape index: {}]
  %s5 = inlined_call_operand.hbm [shape: f32[16,32], index: 5, kind: output, shape index: {}]
  %s6 = sld [smem:[#allocation0]]
  $region38: #{tpu_custom_call.1} parent=0
    _
  %s8 = ssub.s32 1, %s6
  %s9 = scalar_select 0, %s8, %s6
  $region1: #{tpu_custom_call.1} parent=0
    #allocation3 [shape = 'u8[8192]{0}', space=vmem, size = 0x2000, scoped, tag = 'output window, operand 0, single buffered']
    #allocation4 [shape = 's32[1]{0}', space=sflag, size = 0x4, scoped, tag = 'scoped memory for tpu_custom_call.1']
    %10 = vsyncpa [#allocation4], 0
    // Predicated region
    $region2: #{tpu_custom_call.1} parent=1 // pred_check
      _
    $region3: #{tpu_custom_call.1} parent=1 // pred_check_branch
      %12 = sbr.rel (0) target = $region5
    $region4: #{tpu_custom_call.1} parent=1 // pred_region
      _
    $region5: #{tpu_custom_call.1} parent=1 // pred_fallthru
      _
    // Predicated region
    $region6: #{tpu_custom_call.1} parent=1 // pred_check
      _
    $region7: #{tpu_custom_call.1} parent=1 // pred_check_branch
      %14 = sbr.rel (0) target = $region9
    $region8: #{tpu_custom_call.1} parent=1 // pred_region
      _
    $region9: #{tpu_custom_call.1} parent=1 // pred_fallthru
      _
    // Predicated region
    $region10: #{tpu_custom_call.1} parent=1 // pred_check
      _
    $region11: #{tpu_custom_call.1} parent=1 // pred_check_branch
      %16 = sbr.rel (0) target = $region13
    $region12: #{tpu_custom_call.1} parent=1 // pred_region
      _
    $region13: #{tpu_custom_call.1} parent=1 // pred_fallthru
      _
    // Predicated region
    $region14: #{tpu_custom_call.1} parent=1 // pred_check
      _
    $region15: #{tpu_custom_call.1} parent=1 // pred_check_branch
      %18 = sbr.rel (0) target = $region17
    $region16: #{tpu_custom_call.1} parent=1 // pred_region
      _
    $region17: #{tpu_custom_call.1} parent=1 // pred_fallthru
      _
    // Predicated region
    $region18: #{tpu_custom_call.1} parent=1 // pred_check
      _
    $region19: #{tpu_custom_call.1} parent=1 // pred_check_branch
      %20 = sbr.rel (0) target = $region21
    $region20: #{tpu_custom_call.1} parent=1 // pred_region
      _
    $region21: #{tpu_custom_call.1} parent=1 // pred_fallthru
      _
    %p21 = scmp.eq.s32.totalorder 0, 0
    // Predicated region
    $region22: #{tpu_custom_call.1} parent=1 // pred_check
      %p22 = pneg %p21
    $region23: #{tpu_custom_call.1} parent=1 // pred_check_branch
      %24 = sbr.rel (%p22) target = $region25
    $region24: #{tpu_custom_call.1} parent=1 // pred_region
      %vm25 = vcmask 261120
      %26 = vst.msk [vmem:[#allocation2] sm:$0xff] %vm25, 0.0
      %27 = vst.msk [vmem:[#allocation2 + $0x8] sm:$0xff] %vm25, 0.0
    $region25: #{tpu_custom_call.1} parent=1 // pred_fallthru
      _
    %v28 = vld [vmem:[%s0] sm:$0xff]
    %v29 = vld [vmem:[%s0 + $0x8] sm:$0xff]
    %v30 = vld [vmem:[%s1] sm:$0xff]
    %v31 = vld [vmem:[%s1 + $0x8] sm:$0xff]
    %v32 = vld [vmem:[%s1 + $0x10] sm:$0xff]
    %v33 = vld [vmem:[%s1 + $0x18] sm:$0xff]
    %vm34 = vcmask 261120
    %v36 = vsel %vm34, %v28, 0
    %v39 = vsel %vm34, %v29, 0
    %41 = vmatprep.subr.mxu0 0.0
    %42 = vmatpush1.msra.mxu0 0.0
    %43 = vmatprep.subr.mxu0 0.0
    %44 = vmatpush1.msra.mxu0 0.0
    %45 = vmatprep.subr.mxu0 0.0
    %46 = vmatpush1.msra.mxu0 0.0
    %47 = vmatprep.subr.mxu0 0.0
    %48 = vmatpush1.msra.mxu0 0.0
    %49 = vmatprep.subr.mxu0 0.0
    %50 = vmatpush1.msra.mxu0 0.0
    %51 = vmatprep.subr.mxu0 0.0
    %52 = vmatpush1.msra.mxu0 0.0
    %53 = vmatprep.subr.mxu0 0.0
    %54 = vmatpush1.msra.mxu0 0.0
    %55 = vmatprep.subr.mxu0 0.0
    %56 = vmatpush1.msra.mxu0 0.0
    %57 = vmatprep.subr.mxu0 0.0
    %58 = vmatpush1.msra.mxu0 0.0
    %59 = vmatprep.subr.mxu0 0.0
    %60 = vmatpush1.msra.mxu0 0.0
    %61 = vmatprep.subr.mxu0 0.0
    %62 = vmatpush1.msra.mxu0 0.0
    %63 = vmatprep.subr.mxu0 0.0
    %64 = vmatpush1.msra.mxu0 0.0
    %65 = vmatprep.subr.mxu0 0.0
    %66 = vmatpush1.msra.mxu0 %v33
    %67 = vmatprep.subr.mxu0 0.0
    %68 = vmatpush1.msra.mxu0 %v32
    %69 = vmatprep.subr.mxu0 0.0
    %70 = vmatpush1.msra.mxu0 %v31
    %71 = vmatprep.subr.mxu0 0.0
    %72 = vmatpush1.msra.mxu0 %v30
    %73 = vmatprep.subr.mxu0 0.0
    %74 = vmatpush2.msra.mxu0 0.0
    %75 = vmatprep.subr.mxu0 0.0
    %76 = vmatpush2.msra.mxu0 0.0
    %77 = vmatprep.subr.mxu0 0.0
    %78 = vmatpush2.msra.mxu0 0.0
    %79 = vmatprep.subr.mxu0 0.0
    %80 = vmatpush2.msra.mxu0 0.0
    %81 = vmatprep.subr.mxu0 0.0
    %82 = vmatpush2.msra.mxu0 0.0
    %83 = vmatprep.subr.mxu0 0.0
    %84 = vmatpush2.msra.mxu0 0.0
    %85 = vmatprep.subr.mxu0 0.0
    %86 = vmatpush2.msra.mxu0 0.0
    %87 = vmatprep.subr.mxu0 0.0
    %88 = vmatpush2.msra.mxu0 0.0
    %89 = vmatprep.subr.mxu0 0.0
    %90 = vmatpush2.msra.mxu0 0.0
    %91 = vmatprep.subr.mxu0 0.0
    %92 = vmatpush2.msra.mxu0 0.0
    %93 = vmatprep.subr.mxu0 0.0
    %94 = vmatpush2.msra.mxu0 0.0
    %95 = vmatprep.subr.mxu0 0.0
    %96 = vmatpush2.msra.mxu0 0.0
    %97 = vmatprep.subr.mxu0 0.0
    %98 = vmatpush2.msra.mxu0 0.0
    %99 = vmatprep.subr.mxu0 0.0
    %100 = vmatpush2.msra.mxu0 0.0
    %101 = vmatprep.subr.mxu0 0.0
    %102 = vmatpush2.msra.mxu0 0.0
    %103 = vmatprep.subr.mxu0 0.0
    %104 = vmatpush2.msra.mxu0 0.0
    %105 = vmatprep.mubr.f32.mxu0 0.0
    %106 = vmatmul.mubr.f32.gmra.mxu0 %v36
    %v107 = vpop.f32.mrf.mxu0
    %v108 = vadd.f32 0.0, %v107
    %v109 = vpop.f32.mrf.mxu0
    %110 = vmatprep.mubr.f32.mxu0 0.0
    %111 = vmatmul.mubr.f32.gmra.mxu0 %v39
    %v112 = vpop.f32.mrf.mxu0
    %v113 = vadd.f32 0.0, %v112
    %v114 = vpop.f32.mrf.mxu0
    %115 = vdwg.mxu0
    %v116 = vmax.f32 %v108, 0.0
    %v117 = vmax.f32 %v113, 0.0
    %v118 = vld [vmem:[#allocation2] sm:$0xff]
    %v119 = vld [vmem:[#allocation2 + $0x8] sm:$0xff]
    %v120 = vld [vmem:[%s2] sm:$0xff]
    %v121 = vld [vmem:[%s2 + $0x8] sm:$0xff]
    %v122 = vld [vmem:[%s2 + $0x10] sm:$0xff]
    %v123 = vld [vmem:[%s2 + $0x18] sm:$0xff]
    %v124 = vld [vmem:[%s2 + $0x20] sm:$0xff]
    %v125 = vld [vmem:[%s2 + $0x28] sm:$0xff]
    %v126 = vld [vmem:[%s2 + $0x30] sm:$0xff]
    %v127 = vld [vmem:[%s2 + $0x38] sm:$0xff]
    %v128 = vld [vmem:[%s2 + $0x40] sm:$0xff]
    %v129 = vld [vmem:[%s2 + $0x48] sm:$0xff]
    %v130 = vld [vmem:[%s2 + $0x50] sm:$0xff]
    %v131 = vld [vmem:[%s2 + $0x58] sm:$0xff]
    %v132 = vld [vmem:[%s2 + $0x60] sm:$0xff]
    %v133 = vld [vmem:[%s2 + $0x68] sm:$0xff]
    %v134 = vld [vmem:[%s2 + $0x70] sm:$0xff]
    %v135 = vld [vmem:[%s2 + $0x78] sm:$0xff]
    %136 = vmatprep.subr.mxu0 0.0
    %137 = vmatpush1.msra.mxu0 %v135
    %138 = vmatprep.subr.mxu0 0.0
    %139 = vmatpush1.msra.mxu0 %v134
    %140 = vmatprep.subr.mxu0 0.0
    %141 = vmatpush1.msra.mxu0 %v133
    %142 = vmatprep.subr.mxu0 0.0
    %143 = vmatpush1.msra.mxu0 %v132
    %144 = vmatprep.subr.mxu0 0.0
    %145 = vmatpush1.msra.mxu0 %v131
    %146 = vmatprep.subr.mxu0 0.0
    %147 = vmatpush1.msra.mxu0 %v130
    %148 = vmatprep.subr.mxu0 0.0
    %149 = vmatpush1.msra.mxu0 %v129
    %150 = vmatprep.subr.mxu0 0.0
    %151 = vmatpush1.msra.mxu0 %v128
    %152 = vmatprep.subr.mxu0 0.0
    %153 = vmatpush1.msra.mxu0 %v127
    %154 = vmatprep.subr.mxu0 0.0
    %155 = vmatpush1.msra.mxu0 %v126
    %156 = vmatprep.subr.mxu0 0.0
    %157 = vmatpush1.msra.mxu0 %v125
    %158 = vmatprep.subr.mxu0 0.0
    %159 = vmatpush1.msra.mxu0 %v124
    %160 = vmatprep.subr.mxu0 0.0
    %161 = vmatpush1.msra.mxu0 %v123
    %162 = vmatprep.subr.mxu0 0.0
    %163 = vmatpush1.msra.mxu0 %v122
    %164 = vmatprep.subr.mxu0 0.0
    %165 = vmatpush1.msra.mxu0 %v121
    %166 = vmatprep.subr.mxu0 0.0
    %167 = vmatpush1.msra.mxu0 %v120
    %168 = vmatprep.subr.mxu0 0.0
    %169 = vmatpush2.msra.mxu0 0.0
    %170 = vmatprep.subr.mxu0 0.0
    %171 = vmatpush2.msra.mxu0 0.0
    %172 = vmatprep.subr.mxu0 0.0
    %173 = vmatpush2.msra.mxu0 0.0
    %174 = vmatprep.subr.mxu0 0.0
    %175 = vmatpush2.msra.mxu0 0.0
    %176 = vmatprep.subr.mxu0 0.0
    %177 = vmatpush2.msra.mxu0 0.0
    %178 = vmatprep.subr.mxu0 0.0
    %179 = vmatpush2.msra.mxu0 0.0
    %180 = vmatprep.subr.mxu0 0.0
    %181 = vmatpush2.msra.mxu0 0.0
    %182 = vmatprep.subr.mxu0 0.0
    %183 = vmatpush2.msra.mxu0 0.0
    %184 = vmatprep.subr.mxu0 0.0
    %185 = vmatpush2.msra.mxu0 0.0
    %186 = vmatprep.subr.mxu0 0.0
    %187 = vmatpush2.msra.mxu0 0.0
    %188 = vmatprep.subr.mxu0 0.0
    %189 = vmatpush2.msra.mxu0 0.0
    %190 = vmatprep.subr.mxu0 0.0
    %191 = vmatpush2.msra.mxu0 0.0
    %192 = vmatprep.subr.mxu0 0.0
    %193 = vmatpush2.msra.mxu0 0.0
    %194 = vmatprep.subr.mxu0 0.0
    %195 = vmatpush2.msra.mxu0 0.0
    %196 = vmatprep.subr.mxu0 0.0
    %197 = vmatpush2.msra.mxu0 0.0
    %198 = vmatprep.subr.mxu0 0.0
    %199 = vmatpush2.msra.mxu0 0.0
    %200 = vmatprep.mubr.f32.mxu0 0.0
    %201 = vmatmul.mubr.f32.gmra.mxu0 %v116
    %v202 = vpop.f32.mrf.mxu0
    %v203 = vadd.f32 0.0, %v202
    %v204 = vpop.f32.mrf.mxu0
    %205 = vmatprep.mubr.f32.mxu0 0.0
    %206 = vmatmul.mubr.f32.gmra.mxu0 %v117
    %v207 = vpop.f32.mrf.mxu0
    %v208 = vadd.f32 0.0, %v207
    %v209 = vpop.f32.mrf.mxu0
    %210 = vdwg.mxu0
    %v211 = vadd.f32 %v118, %v203
    %v212 = vadd.f32 %v119, %v208
    %213 = vst.msk [vmem:[#allocation2] sm:$0xff] %vm34, %v211
    %214 = vst.msk [vmem:[#allocation2 + $0x8] sm:$0xff] %vm34, %v212
    // Predicated region
    $region26: #{tpu_custom_call.1} parent=1 // pred_check
      %p215 = pneg %p21
    $region27: #{tpu_custom_call.1} parent=1 // pred_check_branch
      %217 = sbr.rel (%p215) target = $region29
    $region28: #{tpu_custom_call.1} parent=1 // pred_region
      %v218 = vld [vmem:[#allocation2] sm:$0xff]
      %v219 = vld [vmem:[#allocation2 + $0x8] sm:$0xff]
      %v220 = vadd.f32 %v218, %v28
      %v221 = vadd.f32 %v219, %v29
      %v222 = vsel %vm34, %v220, 0.0
      %223 = vadd.xlane.f32.xlu0 %v222
      %v224 = vpop.xlane.xlu0 %223
      %v225 = vsel %vm34, %v221, 0.0
      %226 = vadd.xlane.f32.xlu0 %v225
      %v227 = vpop.xlane.xlu0 %226
      %v228 = vrcp.pop 32.0
      %v229 = vmul.f32 %v224, %v228
      %v230 = vmul.f32 %v227, %v228
      %v231 = vsub.f32 %v220, %v229
      %v232 = vsub.f32 %v221, %v230
      %v233 = vmul.f32 %v231, %v231
      %v234 = vmul.f32 %v232, %v232
      %v235 = vsel %vm34, %v233, 0.0
      %236 = vadd.xlane.f32.xlu0 %v235
      %v237 = vpop.xlane.xlu0 %236
      %v238 = vsel %vm34, %v234, 0.0
      %239 = vadd.xlane.f32.xlu0 %v238
      %v240 = vpop.xlane.xlu0 %239
      %v241 = vmul.f32 %v237, %v228
      %v242 = vmul.f32 %v240, %v228
      %v243 = vadd.f32 %v241, 1e-05
      %v244 = vadd.f32 %v242, 1e-05
      %v245 = vrsqrt.pop %v243
      %v246 = vrsqrt.pop %v244
      %v247 = vmul.f32 %v231, %v245
      %v248 = vmul.f32 %v232, %v246
      %v249 = vld [vmem:[%s3] sm:$0x1]
      %v251 = vlaneseq
      %v252 = vshrl.u32 %v251, 7
      %v253 = vsub.s32 0, %v252
      %v254 = vrot.slane %v249, %v253
      %v256 = vmul.f32 %v247, %v254
      %v257 = vmul.f32 %v248, %v254
      %v258 = vld [vmem:[%s4] sm:$0x1]
      %v260 = vlaneseq
      %v261 = vshrl.u32 %v260, 7
      %v262 = vsub.s32 0, %v261
      %v263 = vrot.slane %v258, %v262
      %v265 = vadd.f32 %v256, %v263
      %v266 = vadd.f32 %v257, %v263
      %267 = vst.msk [vmem:[#allocation3] sm:$0xff] %vm34, %v265
      %268 = vst.msk [vmem:[#allocation3 + $0x8] sm:$0xff] %vm34, %v266
    $region29: #{tpu_custom_call.1} parent=1 // pred_fallthru
      _
    // Predicated region
    $region30: #{tpu_custom_call.1} parent=1 // pred_check
      _
    $region31: #{tpu_custom_call.1} parent=1 // pred_check_branch
      %270 = sbr.rel (0) target = $region33
    $region32: #{tpu_custom_call.1} parent=1 // pred_region
      %s272 = ssub.s32 256, 256
      %273 = vsyncadd [#allocation4], %s272
      %s274 = sshll.u32 [#allocation3], 4
      %s275 = int_to_ptr.vmem [resolvable:$true] %s274
      %280 = dma.vmem_to_hbm [thread:$0]  %s275, 256, %s5, [#allocation4], 128, 128, 8
    $region33: #{tpu_custom_call.1} parent=1 // pred_fallthru
      _
    // Predicated region
    $region34: #{tpu_custom_call.1} parent=1 // pred_check
      _
    $region35: #{tpu_custom_call.1} parent=1 // pred_check_branch
      %282 = sbr.rel (0) target = $region37
    $region36: #{tpu_custom_call.1} parent=1 // pred_region
      %283 = dma.done [#allocation4], 256
    $region37: #{tpu_custom_call.1} parent=1 // pred_fallthru
      _
    %284 = vsyncpa [#allocation4], 1

</llo_original>
